<compile_context>
chip_gen: v5e
topology: v5e:2x2
jax: 0.10.0
libtpu: 0.0.40
codegen_flags: <defaults>
</compile_context>

<pallas_src>
import math
import functools

import numpy as np
import jax
import jax.numpy as jnp
from jax.experimental import pallas as pl
from jax.experimental.pallas import tpu as pltpu


# ---------------------------------------------------------------------------
# Positional-encoding table. Reproduces the PyTorch __init__ loop exactly,
# including the nonstandard cos exponent 2*(i+1)/d_model.
# ---------------------------------------------------------------------------
def _build_pe(d_model: int, max_seq_len: int, dtype=jnp.float32) -> jnp.ndarray:
    pe = np.zeros((max_seq_len, d_model), dtype=np.float32)
    pos = np.arange(max_seq_len, dtype=np.float64)[:, None]          # (S, 1)
    i_even = np.arange(0, d_model, 2, dtype=np.float64)[None, :]     # (1, D/2)
    i_odd = i_even + 1.0
    pe[:, 0::2] = np.sin(pos / np.power(10000.0, 2.0 * i_even / d_model))
    pe[:, 1::2] = np.cos(pos / np.power(10000.0, 2.0 * i_odd / d_model))
    return jnp.asarray(pe, dtype=dtype)                              # (max_seq_len, D)


def _pos_enc_kernel(x_ref, pe_ref, o_ref, *, scale):
    # VPU elementwise hot path: scale x and add the positional encoding
    # (pe broadcasts over sublanes in the flattened small-D path).
    o_ref[...] = x_ref[...] * scale + pe_ref[...]


_TARGET_BLOCK_BYTES = 4 * 1024 * 1024   # ~4 MiB tiles; ~6x live (x/pe/out, 2 bufs) = 24 MiB


def _vmem_limit_bytes() -> int:
    try:
        cap = int(pltpu.get_tpu_info().vmem_capacity_bytes)
    except Exception:
        cap = 128 * 1024 * 1024
    # ~48 MiB scoped on v7x (64 MiB physical), 64 MiB on v5e/v6e (128 MiB physical).
    return int(min(cap * 3 // 4, 64 * 1024 * 1024))


def _cdiv(a: int, b: int) -> int:
    return -(-a // b)


def _round_up(a: int, m: int) -> int:
    return _cdiv(a, m) * m


def _pick_tile(total: int, unit: int, bytes_per_unit: int,
               other_steps: int, min_steps: int = 8) -> int:
    """Largest multiple of `unit` that fits the block-byte budget, then shrink
    (halving) until the total grid has >= min_steps steps (v7x: 2 TensorCores
    want >= 2 each plus pipeline overlap), when the problem is big enough."""
    max_by_budget = max(unit, (_TARGET_BLOCK_BYTES // bytes_per_unit) // unit * unit)
    t = min(max_by_budget, _round_up(total, unit))
    if _cdiv(total, unit) * other_steps >= min_steps:
        while t > unit and _cdiv(total, t) * other_steps < min_steps:
            t = max(unit, _round_up(t // 2, unit))
    return t


class PositionalEncoder:
    """out = x * sqrt(d_model) + pe[:, :seq_len], via a Pallas TPU kernel."""

    def __init__(self, d_model: int, max_seq_len: int, dtype=jnp.float32):
        self.d_model = d_model
        self.max_seq_len = max_seq_len
        self.scale = math.sqrt(d_model)
        # Precompute pe once in the model dtype: no per-call slice/convert ops.
        self.pe = _build_pe(d_model, max_seq_len, dtype)   # (max_seq_len, d_model)

    def __call__(self, x: jnp.ndarray) -> jnp.ndarray:
        B, S, D = x.shape
        assert D == self.d_model, "last dim must equal d_model"
        assert S <= self.max_seq_len, "sequence longer than max_seq_len"

        itemsize = jnp.dtype(x.dtype).itemsize
        sub = {4: 8, 2: 16, 1: 32}.get(itemsize, 8)   # native packed sublane rows
        kernel = functools.partial(_pos_enc_kernel, scale=self.scale)
        vmem_limit = _vmem_limit_bytes()
        pe = self.pe
        if pe.dtype != x.dtype:
            pe = pe.astype(x.dtype)   # only if the call dtype differs from init dtype

        if D % 128 == 0:
            # ---- Path A: lane-dense D. Tile seq rows; ragged last tile OK. ----
            TS = _pick_tile(S, sub, D * itemsize, B)
            n_s_tiles = _cdiv(S, TS)

            return pl.pallas_call(
                kernel,
                out_shape=jax.ShapeDtypeStruct((B, S, D), x.dtype),
                grid_spec=pltpu.PrefetchScalarGridSpec(
                    num_scalar_prefetch=0,
                    grid=(n_s_tiles, B),   # batch innermost -> pe block reused, not re-DMA'd
                    in_specs=[
                        pl.BlockSpec((None, TS, D), lambda t, b: (b, t, 0)),
                        # pe indexed straight out of the full (max_seq_len, D) table;
                        # block index constant across the inner batch loop.
                        pl.BlockSpec((TS, D), lambda t, b: (t, 0)),
                    ],
                    out_specs=pl.BlockSpec((None, TS, D), lambda t, b: (b, t, 0)),
                ),
                compiler_params=pltpu.CompilerParams(
                    dimension_semantics=("parallel", "parallel"),
                    vmem_limit_bytes=vmem_limit,
                ),
            )(x, pe)

        # ---- Path B: small / unaligned D -> flatten (S, D) into the lane axis. ----
        # TODO(synk): for B < 8 one could fold part of F into sublanes to avoid
        # sublane-masked stores; low priority (this path is HBM-bound anyway).
        F = S * D
        x2 = x.reshape(B, F)
        pe2 = pe[:S].reshape(1, F)
        TC = _pick_tile(F, 128, max(B, 1) * itemsize, 1)   # clamped by VMEM budget
        n_c_tiles = _cdiv(F, TC)

        out2 = pl.pallas_call(
            kernel,
            out_shape=jax.ShapeDtypeStruct((B, F), x.dtype),
            grid_spec=pltpu.PrefetchScalarGridSpec(
                num_scalar_prefetch=0,
                grid=(n_c_tiles,),
                in_specs=[
                    pl.BlockSpec((B, TC), lambda c: (0, c)),   # all batches, one col tile
                    pl.BlockSpec((1, TC), lambda c: (0, c)),   # pe: same col tile
                ],
                out_specs=pl.BlockSpec((B, TC), lambda c: (0, c)),
            ),
            compiler_params=pltpu.CompilerParams(
                dimension_semantics=("parallel",),
                vmem_limit_bytes=vmem_limit,
            ),
        )(x2, pe2)
        return out2.reshape(B, S, D)


if __name__ == "__main__":
    key = jax.random.PRNGKey(0)
    k1, k2 = jax.random.split(key)

    # Case A: lane-dense d_model (multiple of 128) with a ragged seq tile (S=20).
    enc_a = PositionalEncoder(d_model=128, max_seq_len=40)
    xa = jax.random.normal(k1, (2, 20, 128), dtype=jnp.float32)
    outa = jax.block_until_ready(enc_a(xa))
    refa = xa * math.sqrt(128) + enc_a.pe[None, :20, :]
    np.testing.assert_allclose(np.asarray(outa), np.asarray(refa),
                               rtol=1e-6, atol=1e-6)

    # Case B: small d_model (32) -> flattened lane-dense path.
    enc_b = PositionalEncoder(d_model=32, max_seq_len=16)
    xb = jax.random.normal(k2, (2, 8, 32), dtype=jnp.float32)
    outb = jax.block_until_ready(enc_b(xb))
    refb = xb * math.sqrt(32) + enc_b.pe[None, :8, :]
    np.testing.assert_allclose(np.asarray(outb), np.asarray(refb),
                               rtol=1e-6, atol=1e-6)

    print("KERNEL_OK")
</pallas_src>

<mosaic_0001>
module attributes {stable_mosaic.version = 11 : i64} {
  func.func @_pos_enc_kernel(%arg0: i32, %arg1: i32, %arg2: memref<1x24x128xf32, #tpu.memory_space<vmem>>, %arg3: memref<24x128xf32, #tpu.memory_space<vmem>>, %arg4: memref<1x24x128xf32, #tpu.memory_space<vmem>>) attributes {dimension_semantics = [#tpu.dimension_semantics<parallel>, #tpu.dimension_semantics<parallel>], iteration_bounds = array<i64: 1, 2>, scalar_prefetch = 0 : i64, scratch_operands = 0 : i64, tpu.core_type = #tpu.core_type<tc>, window_params = [{transform_indices = @transform_0, window_bounds = array<i64: 1, 24, 128>}, {transform_indices = @transform_1, window_bounds = array<i64: 24, 128>}, {transform_indices = @transform_2, window_bounds = array<i64: 1, 24, 128>}]} {
    %c0 = arith.constant 0 : index
    %c0_0 = arith.constant 0 : index
    %c0_1 = arith.constant 0 : index
    %0 = vector.load %arg2[%c0, %c0_0, %c0_1] : memref<1x24x128xf32, #tpu.memory_space<vmem>>, vector<1x24x128xf32>
    %1 = vector.shape_cast %0 : vector<1x24x128xf32> to vector<24x128xf32>
    %cst = arith.constant 11.3137083 : f32
    %2 = vector.broadcast %cst : f32 to vector<24x128xf32>
    %3 = arith.mulf %1, %2 : vector<24x128xf32>
    %c0_2 = arith.constant 0 : index
    %c0_3 = arith.constant 0 : index
    %4 = vector.load %arg3[%c0_2, %c0_3] : memref<24x128xf32, #tpu.memory_space<vmem>>, vector<24x128xf32>
    %5 = arith.addf %3, %4 : vector<24x128xf32>
    %c0_4 = arith.constant 0 : index
    %c0_5 = arith.constant 0 : index
    %c0_6 = arith.constant 0 : index
    %6 = vector.load %arg4[%c0_4, %c0_5, %c0_6] : memref<1x24x128xf32, #tpu.memory_space<vmem>>, vector<1x24x128xf32>
    %7 = vector.shape_cast %6 : vector<1x24x128xf32> to vector<24x128xf32>
    %8 = vector.shape_cast %5 : vector<24x128xf32> to vector<1x24x128xf32>
    tpu.vector_store %arg4[%c0_4, %c0_5, %c0_6], %8 {strides = array<i32>} : memref<1x24x128xf32, #tpu.memory_space<vmem>>, vector<1x24x128xf32>,
    return
  }
  func.func @transform_0(%arg0: i32, %arg1: i32) -> (i32, i32, i32) {
    %c0_i32 = arith.constant 0 : i32
    %c0_i32_0 = arith.constant 0 : i32
    return %arg1, %arg0, %c0_i32 : i32, i32, i32
  }
  func.func @transform_1(%arg0: i32, %arg1: i32) -> (i32, i32) {
    %c0_i32 = arith.constant 0 : i32
    %c0_i32_0 = arith.constant 0 : i32
    return %arg0, %c0_i32 : i32, i32
  }
  func.func @transform_2(%arg0: i32, %arg1: i32) -> (i32, i32, i32) {
    %c0_i32 = arith.constant 0 : i32
    %c0_i32_0 = arith.constant 0 : i32
    return %arg1, %arg0, %c0_i32 : i32, i32, i32
  }
}

</mosaic_0001>

<llo_original>
// kernel: tpu_custom_call.1
$region0: #{tpu_custom_call.1}
  #allocation0 [shape = 'u32[]', space=smem, size = 0x4, offset = 0x4, fixed_abs, tag = 'smem constant byte address 0x4 - core index']
  #allocation1 [shape = 'u32[72,128]{1,0:T(1,128)}', space=vmem, size = 0x9000, scoped, tag = 'internal scratch']
  %s0 = inlined_call_operand.vmem [shape: f32[2,20,128], index: 0, kind: input, shape index: {}]
  %s1 = inlined_call_operand.vmem [shape: f32[40,128], index: 1, kind: input, shape index: {}]
  %s2 = inlined_call_operand.vmem [shape: f32[2,20,128], index: 2, kind: output, shape index: {}]
  %s3 = sld [smem:[#allocation0]]
  $region41: #{tpu_custom_call.1} parent=0
    _
  %s5 = ssub.s32 1, %s3
  %s6 = scalar_select 0, %s5, %s3
  loop: start=0, step=1, limit=4
  $region2: #{tpu_custom_call.1} parent=0 // loop_pre_header
    _
  $region3: #{tpu_custom_call.1} parent=0 // loop_header
    %s8 = sphi 0, %s12
    %p9 = scmp.ge.s32.totalorder %s8, 4
    %s15 = sphi 0, %s27
    %s16 = sphi 0, %s23
    %s17 = sphi 0, %s15
    %s18 = sphi 0, %s16
    %s19 = sphi 0, %s17
    %s20 = sphi 0, %s18
    %s32 = sphi 0, %s34
    %s35 = sphi 0, %s32
    %s36 = sphi 0, %s35
    %s52 = sphi 0, %s36
    %s58 = sphi 0, %s60
    %s61 = sphi 0, %s58
    %s62 = sphi 0, %s61
    %s78 = sphi 0, %s62
    %s86 = sphi 0, %s88
    %s89 = sphi 0, %s86
    %s90 = sphi 0, %s89
    %s106 = sphi 0, %s90
  $region4: #{tpu_custom_call.1} parent=0 // loop_header_branch
    %11 = sbr.rel (%p9) target = $region8
  $region5: #{tpu_custom_call.1} parent=0 // loop_body
    %s13 = ssub.s32 %s8, 1
    %s14 = ssub.s32 %s8, 2
    %s21 = sadd.s32 1, %s16
    %p22 = scmp.ge.s32.totalorder %s21, 2
    %s23 = scalar_select %p22, 0, %s21
    %s24 = sadd.s32 1, %s15
    %s25 = scalar_select %p22, %s24, %s15
    %p26 = scmp.ge.s32.totalorder %s25, 1
    %s27 = scalar_select %p26, 0, %s25
    %s28 = ssub.s32 %s16, %s23
    %s29 = ssub.s32 %s15, %s27
    %s30 = sor.u32 %s28, %s29
    %p31 = scmp.eq.s32.totalorder %s30, 0
    %s33 = sadd.s32 %s32, 1
    %s34 = scalar_select %p31, %s32, %s33
    %p37 = pneg %p31
    %p38 = scmp.eq.s32.totalorder %s8, 1
    %p39 = por %p37, %p38
    %p40 = scmp.ne.s32.totalorder %s32, %s35
    %p41 = scmp.eq.s32.totalorder %s8, 0
    %p42 = por %p40, %p41
    %p43 = scmp.ne.s32.totalorder %s32, %s35
    %p44 = scmp.eq.s32.totalorder %s13, 1
    %p45 = por %p43, %p44
    %p46 = scmp.ne.s32.totalorder %s35, %s36
    %p47 = scmp.eq.s32.totalorder %s13, 0
    %p48 = por %p46, %p47
    %p49 = scmp.ne.s32.totalorder %s35, %s36
    %p50 = scmp.eq.s32.totalorder %s14, 1
    %p51 = por %p49, %p50
    %p53 = scmp.ne.s32.totalorder %s36, %s52
    %p54 = scmp.eq.s32.totalorder %s14, 0
    %p55 = por %p53, %p54
    %s56 = ssub.s32 %s15, %s27
    %p57 = scmp.eq.s32.totalorder %s56, 0
    %s59 = sadd.s32 %s58, 1
    %s60 = scalar_select %p57, %s58, %s59
    %p63 = pneg %p57
    %p64 = scmp.eq.s32.totalorder %s8, 1
    %p65 = por %p63, %p64
    %p66 = scmp.ne.s32.totalorder %s58, %s61
    %p67 = scmp.eq.s32.totalorder %s8, 0
    %p68 = por %p66, %p67
    %p69 = scmp.ne.s32.totalorder %s58, %s61
    %p70 = scmp.eq.s32.totalorder %s13, 1
    %p71 = por %p69, %p70
    %p72 = scmp.ne.s32.totalorder %s61, %s62
    %p73 = scmp.eq.s32.totalorder %s13, 0
    %p74 = por %p72, %p73
    %p75 = scmp.ne.s32.totalorder %s61, %s62
    %p76 = scmp.eq.s32.totalorder %s14, 1
    %p77 = por %p75, %p76
    %p79 = scmp.ne.s32.totalorder %s62, %s78
    %p80 = scmp.eq.s32.totalorder %s14, 0
    %p81 = por %p79, %p80
    %s82 = ssub.s32 %s16, %s23
    %s83 = ssub.s32 %s15, %s27
    %s84 = sor.u32 %s82, %s83
    %p85 = scmp.eq.s32.totalorder %s84, 0
    %s87 = sadd.s32 %s86, 1
    %s88 = scalar_select %p85, %s86, %s87
    %p91 = pneg %p85
    %p92 = scmp.eq.s32.totalorder %s8, 1
    %p93 = por %p91, %p92
    %p94 = scmp.ne.s32.totalorder %s86, %s89
    %p95 = scmp.eq.s32.totalorder %s8, 0
    %p96 = por %p94, %p95
    %p97 = scmp.ne.s32.totalorder %s86, %s89
    %p98 = scmp.eq.s32.totalorder %s13, 1
    %p99 = por %p97, %p98
    %p100 = scmp.ne.s32.totalorder %s89, %s90
    %p101 = scmp.eq.s32.totalorder %s13, 0
    %p102 = por %p100, %p101
    %p103 = scmp.ne.s32.totalorder %s89, %s90
    %p104 = scmp.eq.s32.totalorder %s14, 1
    %p105 = por %p103, %p104
    %p107 = scmp.ne.s32.totalorder %s90, %s106
    %p108 = scmp.eq.s32.totalorder %s14, 0
    %p109 = por %p107, %p108
    %p110 = scmp.le.s32.totalorder 1, %s8
    %p111 = scmp.lt.s32.totalorder %s8, 3
    %p112 = pnand %p110, %p111
    %p113 = pneg %p112
    // Predicated region
    $region9: #{tpu_custom_call.1} parent=5 // pred_check
      _
    $region10: #{tpu_custom_call.1} parent=5 // pred_check_branch
      %115 = sbr.rel (%p112) target = $region12
    $region11: #{tpu_custom_call.1} parent=5 // pred_region
      %s116 = ssub.s32 %s8, 1
      // Predicated region
      $region13: #{tpu_custom_call.1} parent=11 // pred_check
        %p117 = pneg %p74
      $region14: #{tpu_custom_call.1} parent=11 // pred_check_branch
        %119 = sbr.rel (%p117) target = $region16
      $region15: #{tpu_custom_call.1} parent=11 // pred_region
        %s120 = smul.u32 3, %s17
        %s121 = ssub.s32 5, %s120
        %p122 = scmp.lt.s32.totalorder %s121, 3
        %s123 = scalar_select %p122, %s121, 3
        %s124 = smul.u32 8, %s123
        %p125 = scmp.lt.s32.totalorder %s120, 4
        %s126 = scalar_select %p125, %s120, 4
        %s127 = smul.addr %s126, 8
        %s128 = scalar_lea.vmem %s1, %s127
        %s129 = smul.u32 3, %s17
        %s130 = ssub.s32 5, %s129
        %p131 = scmp.lt.s32.totalorder %s130, 3
        %s132 = scalar_select %p131, %s130, 3
        %s133 = smul.u32 8, %s132
      $region16: #{tpu_custom_call.1} parent=11 // pred_fallthru
        _
    $region12: #{tpu_custom_call.1} parent=5 // pred_fallthru
      _
    %p134 = scmp.lt.s32.totalorder %s8, 2
    // Predicated region
    $region17: #{tpu_custom_call.1} parent=5 // pred_check
      %p135 = pneg %p134
    $region18: #{tpu_custom_call.1} parent=5 // pred_check_branch
      %137 = sbr.rel (%p135) target = $region20
    $region19: #{tpu_custom_call.1} parent=5 // pred_region
      // Predicated region
      $region21: #{tpu_custom_call.1} parent=19 // pred_check
        %p138 = pneg %p42
      $region22: #{tpu_custom_call.1} parent=19 // pred_check_branch
        %140 = sbr.rel (%p138) target = $region24
      $region23: #{tpu_custom_call.1} parent=19 // pred_region
        %s141 = smul.u32 3, %s15
        %p142 = scmp.lt.s32.totalorder %s16, 1
        %s143 = scalar_select %p142, %s16, 1
        %p144 = scmp.lt.s32.totalorder %s141, 2
        %s145 = scalar_select %p144, %s141, 2
        %s146 = smul.addr %s143, 3
        %s147 = sadd.s32 %s145, %s146
        %s148 = smul.addr %s147, 8
        %s149 = scalar_lea.vmem %s0, %s148
        %s150 = smul.u32 3, %s15
      $region24: #{tpu_custom_call.1} parent=19 // pred_fallthru
        _
    $region20: #{tpu_custom_call.1} parent=5 // pred_fallthru
      _
    %p151 = scmp.le.s32.totalorder 1, %s8
    %p152 = scmp.lt.s32.totalorder %s8, 3
    %p153 = pnand %p151, %p152
    %p154 = pneg %p153
    // Predicated region
    $region25: #{tpu_custom_call.1} parent=5 // pred_check
      _
    $region26: #{tpu_custom_call.1} parent=5 // pred_check_branch
      %156 = sbr.rel (%p153) target = $region28
    $region27: #{tpu_custom_call.1} parent=5 // pred_region
      %s157 = ssub.s32 %s8, 1
      %s158 = smul.u32 3, %s17
      %p159 = scmp.lt.s32.totalorder %s18, 1
      %s160 = scalar_select %p159, %s18, 1
      %p161 = scmp.lt.s32.totalorder %s158, 2
      %s162 = scalar_select %p161, %s158, 2
      %s163 = smul.addr %s160, 3
      %s164 = sadd.s32 %s162, %s163
      %s165 = smul.addr %s164, 8
      %s166 = scalar_lea.vmem %s0, %s165
      %p167 = pneg %p48
      %p168 = pneg %p45
      %s169 = smul.u32 3, %s17
      %s170 = ssub.s32 5, %s169
      %p171 = scmp.lt.s32.totalorder %s170, 3
      %s172 = scalar_select %p171, %s170, 3
      %s173 = smul.u32 8, %s172
      %p174 = scmp.lt.s32.totalorder %s169, 4
      %s175 = scalar_select %p174, %s169, 4
      %s176 = smul.addr %s175, 8
      %s177 = scalar_lea.vmem %s1, %s176
      %p178 = pneg %p74
      %p179 = pneg %p71
      %p180 = pneg %p102
      %p181 = pneg %p99
      %s182 = smul.u32 3, %s17
      %p183 = scmp.lt.s32.totalorder %s18, 1
      %s184 = scalar_select %p183, %s18, 1
      %p185 = scmp.lt.s32.totalorder %s182, 2
      %s186 = scalar_select %p185, %s182, 2
      %s187 = smul.addr %s184, 3
      %s188 = sadd.s32 %s186, %s187
      %s189 = smul.addr %s188, 8
      %s190 = scalar_lea.vmem %s2, %s189
      %s191 = smul.u32 3, %s17
      %p192 = scmp.lt.s32.totalorder %s18, 1
      %s193 = scalar_select %p192, %s18, 1
      %p194 = scmp.lt.s32.totalorder %s191, 2
      %s195 = scalar_select %p194, %s191, 2
      %s196 = smul.addr %s193, 3
      %s197 = sadd.s32 %s195, %s196
      %s198 = smul.addr %s197, 8
      %s199 = scalar_lea.vmem %s0, %s198
      %s200 = smul.u32 3, %s17
      %s201 = smul.u32 3, %s17
      %s202 = ssub.s32 5, %s201
      %p203 = scmp.lt.s32.totalorder %s202, 3
      %s204 = scalar_select %p203, %s202, 3
      %s205 = smul.u32 8, %s204
      %p206 = scmp.lt.s32.totalorder %s201, 4
      %s207 = scalar_select %p206, %s201, 4
      %s208 = smul.addr %s207, 8
      %s209 = scalar_lea.vmem %s1, %s208
      %s210 = smul.u32 3, %s17
      %s211 = ssub.s32 5, %s210
      %p212 = scmp.lt.s32.totalorder %s211, 3
      %s213 = scalar_select %p212, %s211, 3
      %s214 = smul.u32 8, %s213
      %s215 = smul.u32 3, %s17
      %p216 = scmp.lt.s32.totalorder %s18, 1
      %s217 = scalar_select %p216, %s18, 1
      %p218 = scmp.lt.s32.totalorder %s215, 2
      %s219 = scalar_select %p218, %s215, 2
      %s220 = smul.addr %s217, 3
      %s221 = sadd.s32 %s219, %s220
      %s222 = smul.addr %s221, 8
      %s223 = scalar_lea.vmem %s2, %s222
      %s224 = smul.u32 3, %s17
      %v225 = vld [vmem:[%s199] sm:$0xff]
      %v226 = vld [vmem:[%s199 + $0x8] sm:$0xff]
      %v227 = vld [vmem:[%s199 + $0x10] sm:$0xff]
      %v228 = vmul.f32 %v225, 11.313708
      %v229 = vmul.f32 %v226, 11.313708
      %v230 = vmul.f32 %v227, 11.313708
      %v231 = vld [vmem:[%s209] sm:$0xff]
      %v232 = vld [vmem:[%s209 + $0x8] sm:$0xff]
      %v233 = vld [vmem:[%s209 + $0x10] sm:$0xff]
      %v234 = vadd.f32 %v228, %v231
      %v235 = vadd.f32 %v229, %v232
      %v236 = vadd.f32 %v230, %v233
      %237 = vst [vmem:[%s223] sm:$0xff] %v234
      %238 = vst [vmem:[%s223 + $0x8] sm:$0xff] %v235
      %239 = vst [vmem:[%s223 + $0x10] sm:$0xff] %v236
      %s240 = smul.u32 3, %s17
      %p241 = scmp.lt.s32.totalorder %s18, 1
      %s242 = scalar_select %p241, %s18, 1
      %p243 = scmp.lt.s32.totalorder %s240, 2
      %s244 = scalar_select %p243, %s240, 2
      %s245 = smul.addr %s242, 3
      %s246 = sadd.s32 %s244, %s245
      %s247 = smul.addr %s246, 8
      %s248 = scalar_lea.vmem %s2, %s247
      // Predicated region
      $region29: #{tpu_custom_call.1} parent=27 // pred_check
        %p249 = pneg %p99
      $region30: #{tpu_custom_call.1} parent=27 // pred_check_branch
        %251 = sbr.rel (%p249) target = $region32
      $region31: #{tpu_custom_call.1} parent=27 // pred_region
        %s252 = smul.u32 3, %s17
      $region32: #{tpu_custom_call.1} parent=27 // pred_fallthru
        _
    $region28: #{tpu_custom_call.1} parent=5 // pred_fallthru
      _
    %p253 = scmp.le.s32.totalorder 2, %s8
    // Predicated region
    $region33: #{tpu_custom_call.1} parent=5 // pred_check
      %p254 = pneg %p253
    $region34: #{tpu_custom_call.1} parent=5 // pred_check_branch
      %256 = sbr.rel (%p254) target = $region36
    $region35: #{tpu_custom_call.1} parent=5 // pred_region
      %s257 = ssub.s32 %s8, 2
      // Predicated region
      $region37: #{tpu_custom_call.1} parent=35 // pred_check
        %p258 = pneg %p105
      $region38: #{tpu_custom_call.1} parent=35 // pred_check_branch
        %260 = sbr.rel (%p258) target = $region40
      $region39: #{tpu_custom_call.1} parent=35 // pred_region
        %s261 = smul.u32 3, %s19
        %p262 = scmp.lt.s32.totalorder %s20, 1
        %s263 = scalar_select %p262, %s20, 1
        %p264 = scmp.lt.s32.totalorder %s261, 2
        %s265 = scalar_select %p264, %s261, 2
        %s266 = smul.addr %s263, 3
        %s267 = sadd.s32 %s265, %s266
        %s268 = smul.addr %s267, 8
        %s269 = scalar_lea.vmem %s2, %s268
      $region40: #{tpu_custom_call.1} parent=35 // pred_fallthru
        _
    $region36: #{tpu_custom_call.1} parent=5 // pred_fallthru
      _
  $region6: #{tpu_custom_call.1} parent=0 // loop_footer
    %s12 = sadd.s32 1, %s8
  $region7: #{tpu_custom_call.1} parent=0 // loop_footer_branch
    %7 = sbr.rel target = $region3
  $region8: #{tpu_custom_call.1} parent=0 // loop_exit
    _

</llo_original>
